<compile_context>
chip_gen: v5e
topology: v5e:2x2
jax: 0.10.0
libtpu: 0.0.40
codegen_flags: <defaults>
</compile_context>

<pallas_src>
import functools
import math

import jax
import jax.numpy as jnp
from jax import lax
from jax.experimental import pallas as pl
from jax.experimental.pallas import tpu as pltpu


# ----------------------------------------------------------------------------
# Hardware-aware VMEM budgeting (per-generation scoped limits)
# ----------------------------------------------------------------------------
@functools.lru_cache(maxsize=1)
def _vmem_capacity_bytes():
    try:
        info = pltpu.get_tpu_info()
        cap = int(getattr(info, "vmem_capacity_bytes", 0))
        if cap > 0:
            return cap
    except Exception:
        pass
    return 64 * 1024 * 1024  # conservative default (v7x physical VMEM)


def _compiler_params(dimension_semantics, footprint_bytes):
    """dimension_semantics + explicit scoped-VMEM limit sized to the footprint."""
    cap = _vmem_capacity_bytes()
    ceiling = max(cap - (16 << 20), 32 << 20)
    limit = int(min(max(2 * footprint_bytes + (8 << 20), 32 << 20), ceiling))
    return pltpu.CompilerParams(dimension_semantics=dimension_semantics,
                                vmem_limit_bytes=limit)


def _attention_vmem_budget():
    cap = _vmem_capacity_bytes()
    return int(min(max(cap // 3, 12 << 20), 48 << 20))


def _projection_vmem_budget():
    cap = _vmem_capacity_bytes()
    return int(min(max(cap // 4, 12 << 20), 32 << 20))


# ----------------------------------------------------------------------------
# Tile pickers (respect the (8,128)-or-full-dim BlockSpec constraint)
# ----------------------------------------------------------------------------
def _pick_row_tile(n, cap=512):
    return n if n <= cap else cap  # ragged M edge: garbage rows are store-masked


def _pick_col_tile(d, cap=512):
    if d <= cap:
        return d
    for step in (256, 128):        # prefer 256-multiples for the v6e/v7x MXU
        t = (cap // step) * step
        while t >= step:
            if d % t == 0:
                return t
            t -= step
    return cap                      # ragged N edge: garbage cols are store-masked


def _pick_k_tile(d, cap=512):
    if d <= cap:
        return d
    t = (cap // 128) * 128
    while t >= 128:
        if d % t == 0:
            return t
        t -= 128
    return d  # no clean divisor: keep full K (a ragged K tile would corrupt sums)


def _pick_q_tile(lq, cap=256):
    if lq <= cap:
        return lq
    for t in range(cap, 7, -8):
        if lq % t == 0:
            return t
    return cap


# ----------------------------------------------------------------------------
# Kernel 1a: K-tiled linear projection  y = x @ W + b  (f32 accumulator)
# ----------------------------------------------------------------------------
def _linear_kernel(x_ref, w_ref, b_ref, o_ref, acc_ref):
    @pl.when(pl.program_id(2) == 0)
    def _():
        acc_ref[...] = jnp.zeros_like(acc_ref)

    acc_ref[...] += jnp.dot(x_ref[...], w_ref[...],
                            preferred_element_type=jnp.float32)

    @pl.when(pl.program_id(2) == pl.num_programs(2) - 1)
    def _():
        o_ref[...] = (acc_ref[...] + b_ref[...]).astype(o_ref.dtype)


def pallas_linear(x2d, w, b2d, *, tm_cap=512, tn_cap=512, tk_cap=512):
    """x2d: (N, d_in), w: (d_in, d_out), b2d: (1, d_out) -> (N, d_out)."""
    N, d_in = x2d.shape
    d_out = w.shape[1]
    tm = _pick_row_tile(N, tm_cap)
    tn = _pick_col_tile(d_out, tn_cap)
    tk = _pick_k_tile(d_in, tk_cap)
    gm, gn, gk = pl.cdiv(N, tm), pl.cdiv(d_out, tn), pl.cdiv(d_in, tk)

    # Stream whichever operand gives less total HBM traffic (exact for gk == 1,
    # harmless otherwise): keeping x resident re-reads W `gm` times, and vice versa.
    x_bytes = N * d_in * x2d.dtype.itemsize
    w_bytes = d_in * d_out * w.dtype.itemsize
    swap = (gm * w_bytes + x_bytes) > (gn * x_bytes + w_bytes)
    if swap:
        grid = (gn, gm, gk)
        x_map = lambda j, i, k: (i, k)
        w_map = lambda j, i, k: (k, j)
        b_map = lambda j, i, k: (0, j)
        o_map = lambda j, i, k: (i, j)
    else:
        grid = (gm, gn, gk)
        x_map = lambda i, j, k: (i, k)
        w_map = lambda i, j, k: (k, j)
        b_map = lambda i, j, k: (0, j)
        o_map = lambda i, j, k: (i, j)

    footprint = 4 * (2 * (tm * tk + tk * tn + tn + tm * tn) + tm * tn)
    cost = pl.CostEstimate(
        flops=2 * N * d_in * d_out, transcendentals=0,
        bytes_accessed=4 * (N * d_in + d_in * d_out + d_out + N * d_out))
    return pl.pallas_call(
        _linear_kernel,
        out_shape=jax.ShapeDtypeStruct((N, d_out), x2d.dtype),
        grid=grid,
        in_specs=[pl.BlockSpec((tm, tk), x_map),
                  pl.BlockSpec((tk, tn), w_map),
                  pl.BlockSpec((1, tn), b_map)],
        out_specs=pl.BlockSpec((tm, tn), o_map),
        scratch_shapes=[pltpu.VMEM((tm, tn), jnp.float32)],
        compiler_params=_compiler_params(("parallel", "parallel", "arbitrary"),
                                         footprint),
        cost_estimate=cost,
    )(x2d, w, b2d)


# ----------------------------------------------------------------------------
# Kernel 1b: fused multi-projection (QKV or KV) sharing one HBM read of x
# ----------------------------------------------------------------------------
def _fused_proj_kernel(x_ref, *refs):
    n = len(refs) // 3
    w_refs, b_refs, o_refs = refs[:n], refs[n:2 * n], refs[2 * n:]
    x = x_ref[...]
    for w_ref, b_ref, o_ref in zip(w_refs, b_refs, o_refs):
        o_ref[...] = (jnp.dot(x, w_ref[...], preferred_element_type=jnp.float32)
                      + b_ref[...]).astype(o_ref.dtype)


def pallas_fused_projections(x2d, weights, biases, *, tm_cap=256):
    """n projections of the same activation: returns n (N, d_out) arrays."""
    n = len(weights)
    N, d_in = x2d.shape
    d_out = weights[0].shape[1]
    tm = _pick_row_tile(N, tm_cap)
    budget = _projection_vmem_budget()

    # d_out tiling so the n double-buffered weight panels fit the VMEM budget.
    tn = None
    footprint = 0
    cands = ([d_out] if d_out <= 512 else []) + \
            [c for c in (512, 384, 256, 128) if c <= d_out]
    for c in cands:
        if c != d_out and c % 128 != 0:
            continue
        fp = 4 * (2 * tm * d_in + n * 2 * (d_in * c + c + tm * c))
        if fp <= budget:
            tn, footprint = c, fp
            break
    if tn is None:
        # Even a 128-wide un-K-tiled panel does not fit: use K-tiled linears.
        return tuple(pallas_linear(x2d, w, b) for w, b in zip(weights, biases))

    gm, gn = pl.cdiv(N, tm), pl.cdiv(d_out, tn)
    x_spec = pl.BlockSpec((tm, d_in), lambda i, j: (i, 0))   # resident across j
    w_spec = pl.BlockSpec((d_in, tn), lambda i, j: (0, j))
    b_spec = pl.BlockSpec((1, tn), lambda i, j: (0, j))
    o_spec = pl.BlockSpec((tm, tn), lambda i, j: (i, j))
    cost = pl.CostEstimate(
        flops=n * 2 * N * d_in * d_out, transcendentals=0,
        bytes_accessed=4 * (N * d_in + n * (d_in * d_out + d_out + N * d_out)))
    return pl.pallas_call(
        _fused_proj_kernel,
        out_shape=tuple(jax.ShapeDtypeStruct((N, d_out), x2d.dtype)
                        for _ in range(n)),
        grid=(gm, gn),
        in_specs=[x_spec] + [w_spec] * n + [b_spec] * n,
        out_specs=tuple(o_spec for _ in range(n)),
        compiler_params=_compiler_params(("parallel", "parallel"), footprint),
        cost_estimate=cost,
    )(x2d, *weights, *biases)


# ----------------------------------------------------------------------------
# Kernel 2: per-head scaled dot-product attention.
# Heads are split by BlockSpec-slicing the d_model axis; ctx is written directly
# into (B, Lq, d_model) (lane-dense g*d_head block) and attn into (H, B, Lq, Lk).
# ----------------------------------------------------------------------------
def _mha_attn_kernel(q_ref, k_ref, v_ref, *out_refs, heads_per_block, d_head,
                     inv_sqrt_dim, exact_softmax):
    ctx_ref = out_refs[0]
    attn_ref = out_refs[1] if len(out_refs) > 1 else None
    q = q_ref[0] * inv_sqrt_dim            # (tq, g*Dh); fold 1/sqrt(d) into q
    k = k_ref[0]                           # (Lk, g*Dh)
    v = v_ref[0]
    contract = (((1,), (1,)), ((), ()))    # q @ k^T without materializing k.T
    for h in range(heads_per_block):
        lo, hi = h * d_head, (h + 1) * d_head
        s = lax.dot_general(q[:, lo:hi], k[:, lo:hi], contract,
                            preferred_element_type=jnp.float32)     # (tq, Lk)
        m = jnp.max(s, axis=-1, keepdims=True)
        e = jnp.exp(s - m)
        denom = jnp.sum(e, axis=-1, keepdims=True)
        if exact_softmax:
            p = e / denom                                   # attn is returned: exact
        else:
            p = e * pl.reciprocal(denom, approx=True)       # ctx-only: EUP approx
        ctx = jnp.dot(p.astype(v.dtype), v[:, lo:hi],
                      preferred_element_type=jnp.float32)
        ctx_ref[0, :, lo:hi] = ctx.astype(ctx_ref.dtype)
        if attn_ref is not None:
            attn_ref[h, 0, :, :] = p.astype(attn_ref.dtype)


def _pick_head_group(num_heads, d_head, batch, lq, lk, tq, budget, return_attn):
    # g*d_head must be a multiple of 128 (lane-dense ctx stores, legal BlockSpec)
    # or span the full d_model (g == num_heads).
    cands = [g for g in range(1, num_heads + 1)
             if num_heads % g == 0 and ((g * d_head) % 128 == 0 or g == num_heads)]

    def footprint(g):
        gd = g * d_head
        return 4 * (2 * tq * gd                                  # q  (dbl-buffered)
                    + 2 * 2 * lk * gd                            # k, v
                    + 2 * tq * gd                                # ctx out
                    + (2 * g * tq * lk if return_attn else 0)    # attn out
                    + 6 * tq * lk)                               # s/e/p temporaries

    fitting = [g for g in cands if footprint(g) <= budget]
    g = max(fitting) if fitting else min(cands)
    # Keep >= 2 total grid steps so multi-TensorCore chips (v7x) can shard.
    smaller = [c for c in cands if c < g]
    if batch * (num_heads // g) * pl.cdiv(lq, tq) < 2 and smaller:
        g = max(smaller)
    return g, footprint(g)


def pallas_multi_head_attention(q3, k3, v3, num_heads, *, return_attn=True):
    """q3: (B, Lq, d_model), k3/v3: (B, Lk, d_model).
    Returns ctx (B, Lq, d_model) and attn (num_heads, B, Lq, Lk) or None."""
    B, Lq, d_model = q3.shape
    Lk = k3.shape[1]
    d_head = d_model // num_heads
    tq = _pick_q_tile(Lq)
    budget = _attention_vmem_budget()
    g, footprint = _pick_head_group(num_heads, d_head, B, Lq, Lk, tq, budget,
                                    return_attn)
    gd = g * d_head
    grid = (B, num_heads // g, pl.cdiv(Lq, tq))

    q_spec = pl.BlockSpec((1, tq, gd), lambda b, hg, qt: (b, qt, hg))
    kv_spec = pl.BlockSpec((1, Lk, gd), lambda b, hg, qt: (b, 0, hg))
    ctx_spec = pl.BlockSpec((1, tq, gd), lambda b, hg, qt: (b, qt, hg))

    flops = 4 * num_heads * B * Lq * Lk * d_head
    trans = num_heads * B * Lq * Lk
    bytes_accessed = 4 * (2 * B * Lq * d_model + 2 * B * Lk * d_model)

    kernel = functools.partial(
        _mha_attn_kernel, heads_per_block=g, d_head=d_head,
        inv_sqrt_dim=float(1.0 / math.sqrt(d_head)), exact_softmax=return_attn)

    if return_attn:
        out_shape = (jax.ShapeDtypeStruct((B, Lq, d_model), q3.dtype),
                     jax.ShapeDtypeStruct((num_heads, B, Lq, Lk), q3.dtype))
        out_specs = (ctx_spec,
                     pl.BlockSpec((g, 1, tq, Lk), lambda b, hg, qt: (hg, b, qt, 0)))
        bytes_accessed += 4 * num_heads * B * Lq * Lk
    else:
        out_shape = jax.ShapeDtypeStruct((B, Lq, d_model), q3.dtype)
        out_specs = ctx_spec

    out = pl.pallas_call(
        kernel,
        out_shape=out_shape,
        grid=grid,
        in_specs=[q_spec, kv_spec, kv_spec],
        out_specs=out_specs,
        compiler_params=_compiler_params(("parallel", "parallel", "parallel"),
                                         footprint),
        cost_estimate=pl.CostEstimate(flops=flops, transcendentals=trans,
                                      bytes_accessed=bytes_accessed),
    )(q3, k3, v3)
    if return_attn:
        return out[0], out[1]
    return out, None


# ----------------------------------------------------------------------------
# MultiHeadAttention forward (mask=None path)
# ----------------------------------------------------------------------------
def multi_head_attention(query, key, value, params, num_heads, *, return_attn=True):
    # TODO(synk): boolean `mask` (masked_fill with -inf) is not wired through.
    B, Lq, d_model = query.shape
    Lk = key.shape[1]
    assert d_model % num_heads == 0

    if (query is key) and (key is value):
        q2, k2, v2 = pallas_fused_projections(
            query.reshape(B * Lq, d_model),
            (params["wq"], params["wk"], params["wv"]),
            (params["bq"], params["bk"], params["bv"]))
    elif key is value:
        q2 = pallas_linear(query.reshape(B * Lq, d_model), params["wq"], params["bq"])
        k2, v2 = pallas_fused_projections(
            key.reshape(B * Lk, d_model),
            (params["wk"], params["wv"]), (params["bk"], params["bv"]))
    else:
        q2 = pallas_linear(query.reshape(B * Lq, d_model), params["wq"], params["bq"])
        k2 = pallas_linear(key.reshape(B * Lk, d_model), params["wk"], params["bk"])
        v2 = pallas_linear(value.reshape(B * Lk, d_model), params["wv"], params["bv"])

    q3 = q2.reshape(B, Lq, d_model)
    k3 = k2.reshape(B, Lk, d_model)
    v3 = v2.reshape(B, Lk, d_model)

    ctx, attn4 = pallas_multi_head_attention(q3, k3, v3, num_heads,
                                             return_attn=return_attn)
    if attn4 is None:
        return ctx, None
    # (H, B, Lq, Lk) -> (H*B, Lq, Lk): contiguous collapse, no data movement.
    return ctx, attn4.reshape(num_heads * B, Lq, Lk)


# ----------------------------------------------------------------------------
# Pure-JAX reference (highest precision, for self-check)
# ----------------------------------------------------------------------------
def _reference(query, key, value, params, num_heads):
    B, Lq, d_model = query.shape
    d_head = d_model // num_heads
    hi = jax.lax.Precision.HIGHEST

    def proj(x, w, b):
        return jnp.dot(x, w, precision=hi) + b[0]

    def split(x):
        L = x.shape[1]
        x = x.reshape(B, L, num_heads, d_head)
        return jnp.transpose(x, (2, 0, 1, 3)).reshape(B * num_heads, L, d_head)

    q = split(proj(query, params["wq"], params["bq"]))
    k = split(proj(key, params["wk"], params["bk"]))
    v = split(proj(value, params["wv"], params["bv"]))

    score = jnp.einsum("bqd,bkd->bqk", q, k, precision=hi) / math.sqrt(d_head)
    attn = jax.nn.softmax(score, axis=-1)
    ctx = jnp.einsum("bqk,bkd->bqd", attn, v, precision=hi)
    ctx = ctx.reshape(num_heads, B, Lq, d_head)
    ctx = jnp.transpose(ctx, (1, 2, 0, 3)).reshape(B, Lq, d_model)
    return ctx, attn


if __name__ == "__main__":
    B, L, d_model, num_heads = 2, 8, 32, 4

    key0 = jax.random.PRNGKey(0)
    ks = jax.random.split(key0, 10)
    bound = 1.0 / math.sqrt(d_model)  # PyTorch default Linear init range

    params = {
        "wq": jax.random.uniform(ks[0], (d_model, d_model), jnp.float32, -bound, bound),
        "bq": jax.random.uniform(ks[1], (1, d_model), jnp.float32, -bound, bound),
        "wk": jax.random.uniform(ks[2], (d_model, d_model), jnp.float32, -bound, bound),
        "bk": jax.random.uniform(ks[3], (1, d_model), jnp.float32, -bound, bound),
        "wv": jax.random.uniform(ks[4], (d_model, d_model), jnp.float32, -bound, bound),
        "bv": jax.random.uniform(ks[5], (1, d_model), jnp.float32, -bound, bound),
    }

    # --- Case 1: self-attention (fused QKV projection + in-kernel head split) ---
    x = jax.random.normal(ks[6], (B, L, d_model), jnp.float32)
    ctx, attn = multi_head_attention(x, x, x, params, num_heads)
    ref_ctx, ref_attn = _reference(x, x, x, params, num_heads)
    jax.block_until_ready((ctx, attn))
    assert ctx.shape == (B, L, d_model)
    assert attn.shape == (B * num_heads, L, L)
    assert jnp.allclose(ctx, ref_ctx, atol=1e-3, rtol=1e-3)
    assert jnp.allclose(attn, ref_attn, atol=1e-3, rtol=1e-3)

    # --- Case 2: cross-attention, distinct q/k/v and a different k/v length ---
    Lk = 16
    q_in = jax.random.normal(ks[7], (B, L, d_model), jnp.float32)
    k_in = jax.random.normal(ks[8], (B, Lk, d_model), jnp.float32)
    v_in = jax.random.normal(ks[9], (B, Lk, d_model), jnp.float32)
    ctx2, attn2 = multi_head_attention(q_in, k_in, v_in, params, num_heads)
    ref_ctx2, ref_attn2 = _reference(q_in, k_in, v_in, params, num_heads)
    jax.block_until_ready((ctx2, attn2))
    assert ctx2.shape == (B, L, d_model)
    assert attn2.shape == (B * num_heads, L, Lk)
    assert jnp.allclose(ctx2, ref_ctx2, atol=1e-3, rtol=1e-3)
    assert jnp.allclose(attn2, ref_attn2, atol=1e-3, rtol=1e-3)

    # --- Case 2b: encoder-decoder style (key is value) -> fused KV projection ---
    ctx2b, attn2b = multi_head_attention(q_in, k_in, k_in, params, num_heads)
    ref_ctx2b, ref_attn2b = _reference(q_in, k_in, k_in, params, num_heads)
    jax.block_until_ready((ctx2b, attn2b))
    assert jnp.allclose(ctx2b, ref_ctx2b, atol=1e-3, rtol=1e-3)
    assert jnp.allclose(attn2b, ref_attn2b, atol=1e-3, rtol=1e-3)

    # --- Case 3: context-only path (attn writeback disabled, approx reciprocal) ---
    ctx3, attn3 = multi_head_attention(x, x, x, params, num_heads, return_attn=False)
    jax.block_until_ready(ctx3)
    assert attn3 is None
    assert jnp.allclose(ctx3, ref_ctx, atol=2e-3, rtol=2e-3)

    print("KERNEL_OK")
</pallas_src>

<mosaic_0001>
module attributes {stable_mosaic.version = 11 : i64} {
  func.func @_fused_proj_kernel(%arg0: i32, %arg1: i32, %arg2: memref<16x32xf32, #tpu.memory_space<vmem>>, %arg3: memref<32x32xf32, #tpu.memory_space<vmem>>, %arg4: memref<32x32xf32, #tpu.memory_space<vmem>>, %arg5: memref<32x32xf32, #tpu.memory_space<vmem>>, %arg6: memref<1x32xf32, #tpu.memory_space<vmem>>, %arg7: memref<1x32xf32, #tpu.memory_space<vmem>>, %arg8: memref<1x32xf32, #tpu.memory_space<vmem>>, %arg9: memref<16x32xf32, #tpu.memory_space<vmem>>, %arg10: memref<16x32xf32, #tpu.memory_space<vmem>>, %arg11: memref<16x32xf32, #tpu.memory_space<vmem>>) attributes {dimension_semantics = [#tpu.dimension_semantics<parallel>, #tpu.dimension_semantics<parallel>], iteration_bounds = array<i64: 1, 1>, scalar_prefetch = 0 : i64, scratch_operands = 0 : i64, tpu.core_type = #tpu.core_type<tc>, window_params = [{transform_indices = @transform_0, window_bounds = array<i64: 16, 32>}, {transform_indices = @transform_1, window_bounds = array<i64: 32, 32>}, {transform_indices = @transform_2, window_bounds = array<i64: 32, 32>}, {transform_indices = @transform_3, window_bounds = array<i64: 32, 32>}, {transform_indices = @transform_4, window_bounds = array<i64: 1, 32>}, {transform_indices = @transform_5, window_bounds = array<i64: 1, 32>}, {transform_indices = @transform_6, window_bounds = array<i64: 1, 32>}, {transform_indices = @transform_7, window_bounds = array<i64: 16, 32>}, {transform_indices = @transform_8, window_bounds = array<i64: 16, 32>}, {transform_indices = @transform_9, window_bounds = array<i64: 16, 32>}]} {
    %c0 = arith.constant 0 : index
    %c0_0 = arith.constant 0 : index
    %0 = vector.load %arg2[%c0, %c0_0] : memref<16x32xf32, #tpu.memory_space<vmem>>, vector<16x32xf32>
    %c0_1 = arith.constant 0 : index
    %c0_2 = arith.constant 0 : index
    %1 = vector.load %arg3[%c0_1, %c0_2] : memref<32x32xf32, #tpu.memory_space<vmem>>, vector<32x32xf32>
    %cst = arith.constant dense<0.000000e+00> : vector<16x32xf32>
    %2 = tpu.matmul %0, %1, %cst {dimension_numbers = #tpu.dot_dimension_numbers<[1], [0], [0], [1], [0, 0, 1, 1], [], []>} : vector<16x32xf32>, vector<32x32xf32>, vector<16x32xf32> -> vector<16x32xf32>
    %c0_3 = arith.constant 0 : index
    %c0_4 = arith.constant 0 : index
    %3 = vector.load %arg6[%c0_3, %c0_4] : memref<1x32xf32, #tpu.memory_space<vmem>>, vector<1x32xf32>
    %4 = vector.broadcast %3 : vector<1x32xf32> to vector<16x32xf32>
    %5 = arith.addf %2, %4 : vector<16x32xf32>
    %c0_5 = arith.constant 0 : index
    %c0_6 = arith.constant 0 : index
    %6 = vector.load %arg9[%c0_5, %c0_6] : memref<16x32xf32, #tpu.memory_space<vmem>>, vector<16x32xf32>
    tpu.vector_store %arg9[%c0_5, %c0_6], %5 {strides = array<i32>} : memref<16x32xf32, #tpu.memory_space<vmem>>, vector<16x32xf32>,
    %c0_7 = arith.constant 0 : index
    %c0_8 = arith.constant 0 : index
    %7 = vector.load %arg4[%c0_7, %c0_8] : memref<32x32xf32, #tpu.memory_space<vmem>>, vector<32x32xf32>
    %cst_9 = arith.constant dense<0.000000e+00> : vector<16x32xf32>
    %8 = tpu.matmul %0, %7, %cst_9 {dimension_numbers = #tpu.dot_dimension_numbers<[1], [0], [0], [1], [0, 0, 1, 1], [], []>} : vector<16x32xf32>, vector<32x32xf32>, vector<16x32xf32> -> vector<16x32xf32>
    %c0_10 = arith.constant 0 : index
    %c0_11 = arith.constant 0 : index
    %9 = vector.load %arg7[%c0_10, %c0_11] : memref<1x32xf32, #tpu.memory_space<vmem>>, vector<1x32xf32>
    %10 = vector.broadcast %9 : vector<1x32xf32> to vector<16x32xf32>
    %11 = arith.addf %8, %10 : vector<16x32xf32>
    %c0_12 = arith.constant 0 : index
    %c0_13 = arith.constant 0 : index
    %12 = vector.load %arg10[%c0_12, %c0_13] : memref<16x32xf32, #tpu.memory_space<vmem>>, vector<16x32xf32>
    tpu.vector_store %arg10[%c0_12, %c0_13], %11 {strides = array<i32>} : memref<16x32xf32, #tpu.memory_space<vmem>>, vector<16x32xf32>,
    %c0_14 = arith.constant 0 : index
    %c0_15 = arith.constant 0 : index
    %13 = vector.load %arg5[%c0_14, %c0_15] : memref<32x32xf32, #tpu.memory_space<vmem>>, vector<32x32xf32>
    %cst_16 = arith.constant dense<0.000000e+00> : vector<16x32xf32>
    %14 = tpu.matmul %0, %13, %cst_16 {dimension_numbers = #tpu.dot_dimension_numbers<[1], [0], [0], [1], [0, 0, 1, 1], [], []>} : vector<16x32xf32>, vector<32x32xf32>, vector<16x32xf32> -> vector<16x32xf32>
    %c0_17 = arith.constant 0 : index
    %c0_18 = arith.constant 0 : index
    %15 = vector.load %arg8[%c0_17, %c0_18] : memref<1x32xf32, #tpu.memory_space<vmem>>, vector<1x32xf32>
    %16 = vector.broadcast %15 : vector<1x32xf32> to vector<16x32xf32>
    %17 = arith.addf %14, %16 : vector<16x32xf32>
    %c0_19 = arith.constant 0 : index
    %c0_20 = arith.constant 0 : index
    %18 = vector.load %arg11[%c0_19, %c0_20] : memref<16x32xf32, #tpu.memory_space<vmem>>, vector<16x32xf32>
    tpu.vector_store %arg11[%c0_19, %c0_20], %17 {strides = array<i32>} : memref<16x32xf32, #tpu.memory_space<vmem>>, vector<16x32xf32>,
    return
  }
  func.func @transform_0(%arg0: i32, %arg1: i32) -> (i32, i32) {
    %c0_i32 = arith.constant 0 : i32
    %c0_i32_0 = arith.constant 0 : i32
    return %arg0, %c0_i32 : i32, i32
  }
  func.func @transform_1(%arg0: i32, %arg1: i32) -> (i32, i32) {
    %c0_i32 = arith.constant 0 : i32
    %c0_i32_0 = arith.constant 0 : i32
    return %c0_i32, %arg1 : i32, i32
  }
  func.func @transform_2(%arg0: i32, %arg1: i32) -> (i32, i32) {
    %c0_i32 = arith.constant 0 : i32
    %c0_i32_0 = arith.constant 0 : i32
    return %c0_i32, %arg1 : i32, i32
  }
  func.func @transform_3(%arg0: i32, %arg1: i32) -> (i32, i32) {
    %c0_i32 = arith.constant 0 : i32
    %c0_i32_0 = arith.constant 0 : i32
    return %c0_i32, %arg1 : i32, i32
  }
  func.func @transform_4(%arg0: i32, %arg1: i32) -> (i32, i32) {
    %c0_i32 = arith.constant 0 : i32
    %c0_i32_0 = arith.constant 0 : i32
    return %c0_i32, %arg1 : i32, i32
  }
  func.func @transform_5(%arg0: i32, %arg1: i32) -> (i32, i32) {
    %c0_i32 = arith.constant 0 : i32
    %c0_i32_0 = arith.constant 0 : i32
    return %c0_i32, %arg1 : i32, i32
  }
  func.func @transform_6(%arg0: i32, %arg1: i32) -> (i32, i32) {
    %c0_i32 = arith.constant 0 : i32
    %c0_i32_0 = arith.constant 0 : i32
    return %c0_i32, %arg1 : i32, i32
  }
  func.func @transform_7(%arg0: i32, %arg1: i32) -> (i32, i32) {
    %c0_i32 = arith.constant 0 : i32
    return %arg0, %arg1 : i32, i32
  }
  func.func @transform_8(%arg0: i32, %arg1: i32) -> (i32, i32) {
    %c0_i32 = arith.constant 0 : i32
    return %arg0, %arg1 : i32, i32
  }
  func.func @transform_9(%arg0: i32, %arg1: i32) -> (i32, i32) {
    %c0_i32 = arith.constant 0 : i32
    return %arg0, %arg1 : i32, i32
  }
}

</mosaic_0001>

<llo_original>
// kernel: tpu_custom_call.1
$region0: #{tpu_custom_call.1}
  #allocation0 [shape = 'u32[]', space=smem, size = 0x4, offset = 0x4, fixed_abs, tag = 'smem constant byte address 0x4 - core index']
  #allocation1 [shape = 'u32[72,128]{1,0:T(1,128)}', space=vmem, size = 0x9000, scoped, tag = 'internal scratch']
  %s0 = inlined_call_operand.hbm [shape: f32[16,32], index: 0, kind: input, shape index: {}]
  %s1 = inlined_call_operand.hbm [shape: f32[32,32], index: 1, kind: input, shape index: {}]
  %s2 = inlined_call_operand.hbm [shape: f32[32,32], index: 2, kind: input, shape index: {}]
  %s3 = inlined_call_operand.hbm [shape: f32[32,32], index: 3, kind: input, shape index: {}]
  %s4 = inlined_call_operand.vmem [shape: f32[1,32], index: 4, kind: input, shape index: {}]
  %s5 = inlined_call_operand.vmem [shape: f32[1,32], index: 5, kind: input, shape index: {}]
  %s6 = inlined_call_operand.vmem [shape: f32[1,32], index: 6, kind: input, shape index: {}]
  %s7 = inlined_call_operand.hbm [shape: f32[16,32], index: 7, kind: output, shape index: {0}]
  %s8 = inlined_call_operand.hbm [shape: f32[16,32], index: 8, kind: output, shape index: {1}]
  %s9 = inlined_call_operand.hbm [shape: f32[16,32], index: 9, kind: output, shape index: {2}]
  %10 = xla_tuple %s7, %s8, %s9
  %s11 = sld [smem:[#allocation0]]
  $region70: #{tpu_custom_call.1} parent=0
    _
  %s13 = ssub.s32 1, %s11
  %s14 = scalar_select 0, %s13, %s11
  $region1: #{tpu_custom_call.1} parent=0
    #allocation2 [shape = 'u8[8192]{0}', space=vmem, size = 0x2000, scoped, tag = 'input window, operand 0, single buffered']
    #allocation3 [shape = 's32[1]{0}', space=sflag, size = 0x4, scoped, tag = 'scoped memory for tpu_custom_call.1']
    #allocation4 [shape = 's32[1]{0}', space=sflag, size = 0x4, scoped, tag = 'scoped memory for tpu_custom_call.1']
    #allocation5 [shape = 'u8[16384]{0}', space=vmem, size = 0x4000, scoped, tag = 'input window, operand 1, single buffered']
    #allocation6 [shape = 's32[1]{0}', space=sflag, size = 0x4, scoped, tag = 'scoped memory for tpu_custom_call.1']
    #allocation7 [shape = 'u8[16384]{0}', space=vmem, size = 0x4000, scoped, tag = 'input window, operand 2, single buffered']
    #allocation8 [shape = 'u8[16384]{0}', space=vmem, size = 0x4000, scoped, tag = 'input window, operand 3, single buffered']
    #allocation9 [shape = 's32[1]{0}', space=sflag, size = 0x4, scoped, tag = 'scoped memory for tpu_custom_call.1']
    #allocation10 [shape = 'u8[8192]{0}', space=vmem, size = 0x2000, scoped, tag = 'output window, operand 0, single buffered']
    #allocation11 [shape = 'u8[8192]{0}', space=vmem, size = 0x2000, scoped, tag = 'output window, operand 1, single buffered']
    #allocation12 [shape = 's32[1]{0}', space=sflag, size = 0x4, scoped, tag = 'scoped memory for tpu_custom_call.1']
    #allocation13 [shape = 'u8[8192]{0}', space=vmem, size = 0x2000, scoped, tag = 'output window, operand 2, single buffered']
    %15 = vsyncpa [#allocation3], 0
    %16 = vsyncpa [#allocation6], 0
    %17 = vsyncpa [#allocation9], 0
    %18 = vsyncpa [#allocation4], 0
    %19 = vsyncpa [#allocation12], 0
    // Predicated region
    $region2: #{tpu_custom_call.1} parent=1 // pred_check
      _
    $region3: #{tpu_custom_call.1} parent=1 // pred_check_branch
      %21 = sbr.rel (0) target = $region5
    $region4: #{tpu_custom_call.1} parent=1 // pred_region
      %23 = vsyncadd [#allocation3], 0
      %s24 = sshll.u32 %s0, 4
      %s25 = int_to_ptr.hbm [resolvable:$true] %s24
      %s26 = sshll.u32 [#allocation2], 4
      %s27 = int_to_ptr.vmem [resolvable:$true] %s26
      %32 = dma.hbm_to_vmem [thread:$0]  %s25, 256, %s27, [#allocation3], 128, 128, 8
    $region5: #{tpu_custom_call.1} parent=1 // pred_fallthru
      _
    // Predicated region
    $region6: #{tpu_custom_call.1} parent=1 // pred_check
      _
    $region7: #{tpu_custom_call.1} parent=1 // pred_check_branch
      %34 = sbr.rel (0) target = $region9
    $region8: #{tpu_custom_call.1} parent=1 // pred_region
      %36 = vsyncadd [#allocation6], 0
      %s37 = sshll.u32 %s1, 4
      %s38 = int_to_ptr.hbm [resolvable:$true] %s37
      %s39 = sshll.u32 [#allocation5], 4
      %s40 = int_to_ptr.vmem [resolvable:$true] %s39
      %45 = dma.hbm_to_vmem [thread:$0]  %s38, 512, %s40, [#allocation6], 128, 128, 8
    $region9: #{tpu_custom_call.1} parent=1 // pred_fallthru
      _
    // Predicated region
    $region10: #{tpu_custom_call.1} parent=1 // pred_check
      _
    $region11: #{tpu_custom_call.1} parent=1 // pred_check_branch
      %47 = sbr.rel (0) target = $region13
    $region12: #{tpu_custom_call.1} parent=1 // pred_region
      %49 = vsyncadd [#allocation6], 0
      %s50 = sshll.u32 %s2, 4
      %s51 = int_to_ptr.hbm [resolvable:$true] %s50
      %s52 = sshll.u32 [#allocation7], 4
      %s53 = int_to_ptr.vmem [resolvable:$true] %s52
      %58 = dma.hbm_to_vmem [thread:$0]  %s51, 512, %s53, [#allocation6], 128, 128, 8
    $region13: #{tpu_custom_call.1} parent=1 // pred_fallthru
      _
    // Predicated region
    $region14: #{tpu_custom_call.1} parent=1 // pred_check
      _
    $region15: #{tpu_custom_call.1} parent=1 // pred_check_branch
      %60 = sbr.rel (0) target = $region17
    $region16: #{tpu_custom_call.1} parent=1 // pred_region
      %62 = vsyncadd [#allocation9], 0
      %s63 = sshll.u32 %s3, 4
      %s64 = int_to_ptr.hbm [resolvable:$true] %s63
      %s65 = sshll.u32 [#allocation8], 4
      %s66 = int_to_ptr.vmem [resolvable:$true] %s65
      %71 = dma.hbm_to_vmem [thread:$0]  %s64, 512, %s66, [#allocation9], 128, 128, 8
    $region17: #{tpu_custom_call.1} parent=1 // pred_fallthru
      _
    // Predicated region
    $region18: #{tpu_custom_call.1} parent=1 // pred_check
      _
    $region19: #{tpu_custom_call.1} parent=1 // pred_check_branch
      %73 = sbr.rel (0) target = $region21
    $region20: #{tpu_custom_call.1} parent=1 // pred_region
      _
    $region21: #{tpu_custom_call.1} parent=1 // pred_fallthru
      _
    // Predicated region
    $region22: #{tpu_custom_call.1} parent=1 // pred_check
      _
    $region23: #{tpu_custom_call.1} parent=1 // pred_check_branch
      %75 = sbr.rel (0) target = $region25
    $region24: #{tpu_custom_call.1} parent=1 // pred_region
      _
    $region25: #{tpu_custom_call.1} parent=1 // pred_fallthru
      _
    // Predicated region
    $region26: #{tpu_custom_call.1} parent=1 // pred_check
      _
    $region27: #{tpu_custom_call.1} parent=1 // pred_check_branch
      %77 = sbr.rel (0) target = $region29
    $region28: #{tpu_custom_call.1} parent=1 // pred_region
      _
    $region29: #{tpu_custom_call.1} parent=1 // pred_fallthru
      _
    // Predicated region
    $region30: #{tpu_custom_call.1} parent=1 // pred_check
      _
    $region31: #{tpu_custom_call.1} parent=1 // pred_check_branch
      %79 = sbr.rel (0) target = $region33
    $region32: #{tpu_custom_call.1} parent=1 // pred_region
      %81 = dma.done [#allocation3], 256
    $region33: #{tpu_custom_call.1} parent=1 // pred_fallthru
      _
    // Predicated region
    $region34: #{tpu_custom_call.1} parent=1 // pred_check
      _
    $region35: #{tpu_custom_call.1} parent=1 // pred_check_branch
      %83 = sbr.rel (0) target = $region37
    $region36: #{tpu_custom_call.1} parent=1 // pred_region
      %85 = dma.done [#allocation6], 512
    $region37: #{tpu_custom_call.1} parent=1 // pred_fallthru
      _
    // Predicated region
    $region38: #{tpu_custom_call.1} parent=1 // pred_check
      _
    $region39: #{tpu_custom_call.1} parent=1 // pred_check_branch
      %87 = sbr.rel (0) target = $region41
    $region40: #{tpu_custom_call.1} parent=1 // pred_region
      %89 = dma.done [#allocation6], 512
    $region41: #{tpu_custom_call.1} parent=1 // pred_fallthru
      _
    // Predicated region
    $region42: #{tpu_custom_call.1} parent=1 // pred_check
      _
    $region43: #{tpu_custom_call.1} parent=1 // pred_check_branch
      %91 = sbr.rel (0) target = $region45
    $region44: #{tpu_custom_call.1} parent=1 // pred_region
      %93 = dma.done [#allocation9], 512
    $region45: #{tpu_custom_call.1} parent=1 // pred_fallthru
      _
    %v94 = vld [vmem:[#allocation2] sm:$0xff]
    %v95 = vld [vmem:[#allocation2 + $0x8] sm:$0xff]
    %v96 = vld [vmem:[#allocation5] sm:$0xff]
    %v97 = vld [vmem:[#allocation5 + $0x8] sm:$0xff]
    %v98 = vld [vmem:[#allocation5 + $0x10] sm:$0xff]
    %v99 = vld [vmem:[#allocation5 + $0x18] sm:$0xff]
    %v100 = vld [vmem:[%s4] sm:$0x1]
    %v102 = vperm.slane %v100, 0
    %vm104 = vcmask 261120
    %v106 = vsel %vm104, %v94, 0
    %v109 = vsel %vm104, %v95, 0
    %111 = vmatpush.msra.mxu0 0.0
    %112 = vmatpush.msra.mxu0 0.0
    %113 = vmatpush.msra.mxu0 0.0
    %114 = vmatpush.msra.mxu0 0.0
    %115 = vmatpush.msra.mxu0 0.0
    %116 = vmatpush.msra.mxu0 0.0
    %117 = vmatpush.msra.mxu0 0.0
    %118 = vmatpush.msra.mxu0 0.0
    %119 = vmatpush.msra.mxu0 0.0
    %120 = vmatpush.msra.mxu0 0.0
    %121 = vmatpush.msra.mxu0 0.0
    %122 = vmatpush.msra.mxu0 0.0
    %123 = vmatpush.msra.mxu0 %v99
    %124 = vmatpush.msra.mxu0 %v98
    %125 = vmatpush.msra.mxu0 %v97
    %126 = vmatpush.msra.mxu0 %v96
    %127 = vmatmul.f32.gmra.mxu0 %v106
    %v128 = vpop.f32.mrf.mxu0
    %v129 = vadd.f32 %v102, %v128
    %130 = vmatmul.f32.gmra.mxu0 %v109
    %v131 = vpop.f32.mrf.mxu0
    %v132 = vadd.f32 %v102, %v131
    %133 = vdwg.mxu0
    %134 = vst.msk [vmem:[#allocation10] sm:$0xff] %vm104, %v129
    %135 = vst.msk [vmem:[#allocation10 + $0x8] sm:$0xff] %vm104, %v132
    %v136 = vld [vmem:[#allocation7] sm:$0xff]
    %v137 = vld [vmem:[#allocation7 + $0x8] sm:$0xff]
    %v138 = vld [vmem:[#allocation7 + $0x10] sm:$0xff]
    %v139 = vld [vmem:[#allocation7 + $0x18] sm:$0xff]
    %v140 = vld [vmem:[%s5] sm:$0x1]
    %v142 = vperm.slane %v140, 0
    %144 = vmatpush.msra.mxu0 0.0
    %145 = vmatpush.msra.mxu0 0.0
    %146 = vmatpush.msra.mxu0 0.0
    %147 = vmatpush.msra.mxu0 0.0
    %148 = vmatpush.msra.mxu0 0.0
    %149 = vmatpush.msra.mxu0 0.0
    %150 = vmatpush.msra.mxu0 0.0
    %151 = vmatpush.msra.mxu0 0.0
    %152 = vmatpush.msra.mxu0 0.0
    %153 = vmatpush.msra.mxu0 0.0
    %154 = vmatpush.msra.mxu0 0.0
    %155 = vmatpush.msra.mxu0 0.0
    %156 = vmatpush.msra.mxu0 %v139
    %157 = vmatpush.msra.mxu0 %v138
    %158 = vmatpush.msra.mxu0 %v137
    %159 = vmatpush.msra.mxu0 %v136
    %160 = vmatmul.f32.gmra.mxu0 %v106
    %v161 = vpop.f32.mrf.mxu0
    %v162 = vadd.f32 %v142, %v161
    %163 = vmatmul.f32.gmra.mxu0 %v109
    %v164 = vpop.f32.mrf.mxu0
    %v165 = vadd.f32 %v142, %v164
    %166 = vdwg.mxu0
    %167 = vst.msk [vmem:[#allocation11] sm:$0xff] %vm104, %v162
    %168 = vst.msk [vmem:[#allocation11 + $0x8] sm:$0xff] %vm104, %v165
    %v169 = vld [vmem:[#allocation8] sm:$0xff]
    %v170 = vld [vmem:[#allocation8 + $0x8] sm:$0xff]
    %v171 = vld [vmem:[#allocation8 + $0x10] sm:$0xff]
    %v172 = vld [vmem:[#allocation8 + $0x18] sm:$0xff]
    %v173 = vld [vmem:[%s6] sm:$0x1]
    %v175 = vperm.slane %v173, 0
    %177 = vmatpush.msra.mxu0 0.0
    %178 = vmatpush.msra.mxu0 0.0
    %179 = vmatpush.msra.mxu0 0.0
    %180 = vmatpush.msra.mxu0 0.0
    %181 = vmatpush.msra.mxu0 0.0
    %182 = vmatpush.msra.mxu0 0.0
    %183 = vmatpush.msra.mxu0 0.0
    %184 = vmatpush.msra.mxu0 0.0
    %185 = vmatpush.msra.mxu0 0.0
    %186 = vmatpush.msra.mxu0 0.0
    %187 = vmatpush.msra.mxu0 0.0
    %188 = vmatpush.msra.mxu0 0.0
    %189 = vmatpush.msra.mxu0 %v172
    %190 = vmatpush.msra.mxu0 %v171
    %191 = vmatpush.msra.mxu0 %v170
    %192 = vmatpush.msra.mxu0 %v169
    %193 = vmatmul.f32.gmra.mxu0 %v106
    %v194 = vpop.f32.mrf.mxu0
    %v195 = vadd.f32 %v175, %v194
    %196 = vmatmul.f32.gmra.mxu0 %v109
    %v197 = vpop.f32.mrf.mxu0
    %v198 = vadd.f32 %v175, %v197
    %199 = vdwg.mxu0
    %200 = vst.msk [vmem:[#allocation13] sm:$0xff] %vm104, %v195
    %201 = vst.msk [vmem:[#allocation13 + $0x8] sm:$0xff] %vm104, %v198
    // Predicated region
    $region46: #{tpu_custom_call.1} parent=1 // pred_check
      _
    $region47: #{tpu_custom_call.1} parent=1 // pred_check_branch
      %203 = sbr.rel (0) target = $region49
    $region48: #{tpu_custom_call.1} parent=1 // pred_region
      %205 = vsyncadd [#allocation4], 0
      %s206 = sshll.u32 [#allocation10], 4
      %s207 = int_to_ptr.vmem [resolvable:$true] %s206
      %s208 = sshll.u32 %s7, 4
      %s209 = int_to_ptr.hbm [resolvable:$true] %s208
      %214 = dma.vmem_to_hbm [thread:$0]  %s207, 256, %s209, [#allocation4], 128, 128, 8
    $region49: #{tpu_custom_call.1} parent=1 // pred_fallthru
      _
    // Predicated region
    $region50: #{tpu_custom_call.1} parent=1 // pred_check
      _
    $region51: #{tpu_custom_call.1} parent=1 // pred_check_branch
      %216 = sbr.rel (0) target = $region53
    $region52: #{tpu_custom_call.1} parent=1 // pred_region
      %218 = vsyncadd [#allocation12], 0
      %s219 = sshll.u32 [#allocation11], 4
      %s220 = int_to_ptr.vmem [resolvable:$true] %s219
      %s221 = sshll.u32 %s8, 4
      %s222 = int_to_ptr.hbm [resolvable:$true] %s221
      %227 = dma.vmem_to_hbm [thread:$0]  %s220, 256, %s222, [#allocation12], 128, 128, 8
    $region53: #{tpu_custom_call.1} parent=1 // pred_fallthru
      _
    // Predicated region
    $region54: #{tpu_custom_call.1} parent=1 // pred_check
      _
    $region55: #{tpu_custom_call.1} parent=1 // pred_check_branch
      %229 = sbr.rel (0) target = $region57
    $region56: #{tpu_custom_call.1} parent=1 // pred_region
      %231 = vsyncadd [#allocation12], 0
      %s232 = sshll.u32 [#allocation13], 4
      %s233 = int_to_ptr.vmem [resolvable:$true] %s232
      %s234 = sshll.u32 %s9, 4
      %s235 = int_to_ptr.hbm [resolvable:$true] %s234
      %240 = dma.vmem_to_hbm [thread:$0]  %s233, 256, %s235, [#allocation12], 128, 128, 8
    $region57: #{tpu_custom_call.1} parent=1 // pred_fallthru
      _
    // Predicated region
    $region58: #{tpu_custom_call.1} parent=1 // pred_check
      _
    $region59: #{tpu_custom_call.1} parent=1 // pred_check_branch
      %242 = sbr.rel (0) target = $region61
    $region60: #{tpu_custom_call.1} parent=1 // pred_region
      %244 = dma.done [#allocation4], 256
    $region61: #{tpu_custom_call.1} parent=1 // pred_fallthru
      _
    // Predicated region
    $region62: #{tpu_custom_call.1} parent=1 // pred_check
      _
    $region63: #{tpu_custom_call.1} parent=1 // pred_check_branch
      %246 = sbr.rel (0) target = $region65
    $region64: #{tpu_custom_call.1} parent=1 // pred_region
      %248 = dma.done [#allocation12], 256
    $region65: #{tpu_custom_call.1} parent=1 // pred_fallthru
      _
    // Predicated region
    $region66: #{tpu_custom_call.1} parent=1 // pred_check
      _
    $region67: #{tpu_custom_call.1} parent=1 // pred_check_branch
      %250 = sbr.rel (0) target = $region69
    $region68: #{tpu_custom_call.1} parent=1 // pred_region
      %252 = dma.done [#allocation12], 256
    $region69: #{tpu_custom_call.1} parent=1 // pred_fallthru
      _
    %253 = vsyncpa [#allocation3], 1
    %254 = vsyncpa [#allocation6], 1
    %255 = vsyncpa [#allocation9], 1
    %256 = vsyncpa [#allocation4], 1
    %257 = vsyncpa [#allocation12], 1

</llo_original>
